<compile_context>
chip_gen: v7x
topology: tpu7x:2x2x1
jax: 0.10.0
libtpu: 0.0.40
codegen_flags: <defaults>
</compile_context>

<pallas_src>
import functools

import numpy as np

import jax
import jax.numpy as jnp
from jax.experimental import pallas as pl
from jax.experimental.pallas import tpu as pltpu

M_CHANNELS = 5
N_KNOTS = 8
TAU = 0.05

FOLD = 8            # rows of N packed onto the sublane axis per channel
TILE_LANES = 2048   # lanes (folded columns) per grid step  (== 16384 rows/step)
LANE_CHUNK = 128    # lanes per unrolled inner step; [8,128] tiles keep ~30 live vregs


def _bspline_kernel(u_ref, knots_ref, coefs_ref, o_ref, *,
                    m_channels, n_knots, inv_tau, lane_chunk):
    """u_ref/o_ref: [M*8, tile] (8 rows folded on sublanes per channel);
    knots_ref/coefs_ref: [M, K] scalars in SMEM; knots already pre-scaled by 1/tau."""
    tile = u_ref.shape[1]

    for ch in range(m_channels):                       # static; 16 splats hoisted/channel
        r0 = ch * FOLD

        # Per-channel parameter splats, built ONCE per channel (not per chunk) so no
        # broadcast is re-materialized inside the lane-chunk loop.  16 x 1 vreg.
        kb = [jnp.full((FOLD, lane_chunk), knots_ref[ch, k], dtype=jnp.float32)
              for k in range(n_knots)]
        cb = [jnp.full((FOLD, lane_chunk), coefs_ref[ch, k], dtype=jnp.float32)
              for k in range(n_knots)]

        for c0 in range(0, tile, lane_chunk):           # static, fully unrolled
            # scale u by 1/tau once; knots were pre-scaled on the host.
            u = u_ref[r0:r0 + FOLD, c0:c0 + lane_chunk].astype(jnp.float32) * inv_tau

            # |u - knot_k| / tau for every knot; 8 x [8,128] f32 = 8 vregs.
            d = [jnp.abs(u - kb[k]) for k in range(n_knots)]

            # Stable softmax over k: logit_k - max_k logit_k == min_k d - d_k
            mind = d[0]
            for k in range(1, n_knots):
                mind = jnp.minimum(mind, d[k])

            # Fused numerator / denominator; init from k=0 (saves two adds/elem).
            e = jnp.exp(mind - d[0])                    # in (0, 1], EUP
            num = cb[0] * e
            den = e
            for k in range(1, n_knots):
                e = jnp.exp(mind - d[k])
                num = num + cb[k] * e
                den = den + e

            # Exact divide (den in [1, K]); approx reciprocal was the accuracy bug.
            o_ref[r0:r0 + FOLD, c0:c0 + lane_chunk] = (num / den).astype(o_ref.dtype)


@functools.partial(jax.jit, static_argnames=("tau", "tile_lanes", "lane_chunk"))
def _bspline_2d(u2, knots, coefs, tau, tile_lanes, lane_chunk):
    """u2: [N, M] -> [N, M].  Transpose / pad / fold / unfold are fused by XLA here."""
    n, m = u2.shape
    k = knots.shape[1]
    inv_tau = 1.0 / float(tau)

    lane_chunk = max(128, (lane_chunk // 128) * 128)
    rows_per_chunk = FOLD * lane_chunk                      # 1024 rows per lane-chunk

    # --- tiling: pad only to a chunk multiple, keep >=2 steps when possible -------
    n_chunks = max(1, pl.cdiv(n, rows_per_chunk))
    max_chunks_per_step = max(1, tile_lanes // lane_chunk)
    steps = pl.cdiv(n_chunks, max_chunks_per_step)
    if steps == 1 and n_chunks >= 2:
        steps = 2                                           # let v7x's 2 TCs both work
    chunks_per_step = pl.cdiv(n_chunks, steps)
    eff_tile = chunks_per_step * lane_chunk                 # lanes per grid step
    total_lanes = steps * eff_tile                          # divides exactly into grid
    n_rows_pad = total_lanes * FOLD

    # --- prep (one fused pass): rows->lanes, tail pad, 8-row sublane fold ---------
    ut = u2.T                                               # [M, N]
    if ut.dtype != jnp.bfloat16:
        ut = ut.astype(jnp.float32)                         # bf16 stays bf16 in HBM
    ut = jnp.pad(ut, ((0, 0), (0, n_rows_pad - n)))
    uf = (ut.reshape(m, total_lanes, FOLD)
            .transpose(0, 2, 1)
            .reshape(m * FOLD, total_lanes))                # [(m, r) -> m*8+r, lane]

    knots_s = knots.astype(jnp.float32) * inv_tau           # pre-scale by 1/tau (host)
    coefs_s = coefs.astype(jnp.float32)

    kernel = functools.partial(_bspline_kernel, m_channels=m, n_knots=k,
                               inv_tau=inv_tau, lane_chunk=lane_chunk)
    out_dtype = jnp.bfloat16 if u2.dtype == jnp.bfloat16 else jnp.float32

    out_f = pl.pallas_call(
        kernel,
        out_shape=jax.ShapeDtypeStruct((m * FOLD, total_lanes), out_dtype),
        grid_spec=pltpu.PrefetchScalarGridSpec(
            num_scalar_prefetch=0,
            grid=(steps,),
            in_specs=[
                pl.BlockSpec((m * FOLD, eff_tile), lambda i: (0, i)),  # folded rows
                pl.BlockSpec(memory_space=pltpu.MemorySpace.SMEM),     # knots (scalars)
                pl.BlockSpec(memory_space=pltpu.MemorySpace.SMEM),     # coefs (scalars)
            ],
            out_specs=pl.BlockSpec((m * FOLD, eff_tile), lambda i: (0, i)),
        ),
        compiler_params=pltpu.CompilerParams(
            dimension_semantics=("parallel",),   # shards grid steps over v7x's 2 TCs
        ),
    )(uf, knots_s, coefs_s)

    # --- unfold + un-transpose (fused with the slice by XLA) ----------------------
    out = (out_f.reshape(m, FOLD, total_lanes)
                 .transpose(0, 2, 1)
                 .reshape(m, n_rows_pad))[:, :n]
    return out.T.astype(u2.dtype)                            # [N, M], input dtype


def smooth_bspline_forward(u, knots, coefs, tau=TAU, tile_lanes=TILE_LANES,
                           lane_chunk=LANE_CHUNK):
    """Forward pass of SmoothBSplineLayer.  u: (..., m_channels) -> same shape."""
    m = u.shape[-1]
    assert knots.shape == coefs.shape and knots.shape[0] == m
    lead = u.shape[:-1]
    n = int(np.prod(lead)) if lead else 1
    u2 = jnp.asarray(u).reshape(n, m)
    out2 = _bspline_2d(u2, knots, coefs, float(tau), int(tile_lanes), int(lane_chunk))
    return out2.reshape(lead + (m,))


# --------------------------------------------------------------------------------------
# Plain-JAX reference (mirrors the PyTorch forward) and the training-time regularizers.
# TODO(synk): curvature/knot-spacing regularizers are tiny [m_channels, n_knots] scalar
# reductions used only in the training loss; left in plain JAX rather than kernelized.
def reference_forward(u, knots, coefs, tau=TAU):
    diff = u[..., None] - knots
    weights = jax.nn.softmax(-jnp.abs(diff) / tau, axis=-1)
    return jnp.sum(weights * coefs, axis=-1)


def curvature_regularizer(coefs):
    d2 = coefs[:, 2:] - 2.0 * coefs[:, 1:-1] + coefs[:, :-2]
    return jnp.mean(d2 ** 2)


def knot_spacing_regularizer(knots):
    diffs = knots[:, 1:] - knots[:, :-1]
    return jnp.mean((diffs - jnp.mean(diffs, axis=1, keepdims=True)) ** 2)


if __name__ == "__main__":
    key = jax.random.PRNGKey(0)
    ku, kc, ks = jax.random.split(key, 3)

    # u: (batch=2, seq=8, spatial=16, m_channels=5) -> 256 independent rows.
    u = jax.random.normal(ku, (2, 8, 16, M_CHANNELS), dtype=jnp.float32)

    # Parameters exactly as in __init__: knots = linspace(0,1,K) per channel.
    knots = jnp.tile(jnp.linspace(0.0, 1.0, N_KNOTS)[None, :], (M_CHANNELS, 1))
    # coefs init to zeros in the module (output would be trivially 0); use small
    # random values so the kernel exercises the full softmax/spline path.
    coefs = 0.1 * jax.random.normal(kc, (M_CHANNELS, N_KNOTS), dtype=jnp.float32)

    out = smooth_bspline_forward(u, knots, coefs, TAU)
    out = jax.block_until_ready(out)
    assert out.shape == u.shape

    ref = reference_forward(u, knots, coefs, TAU)
    np.testing.assert_allclose(np.asarray(out), np.asarray(ref), rtol=2e-3, atol=5e-5)

    # Ragged row count (21 rows, not a multiple of 128/1024) exercises the padded tail.
    u_small = jax.random.normal(ks, (3, 7, M_CHANNELS), dtype=jnp.float32)
    out_s = jax.block_until_ready(smooth_bspline_forward(u_small, knots, coefs, TAU))
    ref_s = reference_forward(u_small, knots, coefs, TAU)
    np.testing.assert_allclose(np.asarray(out_s), np.asarray(ref_s),
                               rtol=2e-3, atol=5e-5)

    # Training-time regularizers (plain JAX, not kernelized).
    _ = jax.block_until_ready(curvature_regularizer(coefs))
    _ = jax.block_until_ready(knot_spacing_regularizer(knots))

    print("KERNEL_OK")
</pallas_src>

<mosaic_0001>
module attributes {stable_mosaic.version = 11 : i64} {
  func.func @_bspline_kernel(%arg0: i32, %arg1: memref<40x128xf32, #tpu.memory_space<vmem>>, %arg2: memref<5x8xf32, #tpu.memory_space<smem>>, %arg3: memref<5x8xf32, #tpu.memory_space<smem>>, %arg4: memref<40x128xf32, #tpu.memory_space<vmem>>) attributes {dimension_semantics = [#tpu.dimension_semantics<parallel>], iteration_bounds = array<i64: 1>, scalar_prefetch = 0 : i64, scratch_operands = 0 : i64, tpu.core_type = #tpu.core_type<tc>, window_params = [{transform_indices = @transform_0, window_bounds = array<i64: 40, 128>}, {transform_indices = @transform_1, window_bounds = array<i64: 5, 8>}, {transform_indices = @transform_2, window_bounds = array<i64: 5, 8>}, {transform_indices = @transform_3, window_bounds = array<i64: 40, 128>}]} {
    %c0 = arith.constant 0 : index
    %c0_0 = arith.constant 0 : index
    %0 = memref.load %arg2[%c0, %c0_0] : memref<5x8xf32, #tpu.memory_space<smem>>
    %1 = vector.broadcast %0 : f32 to vector<8x128xf32>
    %c0_1 = arith.constant 0 : index
    %c1 = arith.constant 1 : index
    %2 = memref.load %arg2[%c0_1, %c1] : memref<5x8xf32, #tpu.memory_space<smem>>
    %3 = vector.broadcast %2 : f32 to vector<8x128xf32>
    %c0_2 = arith.constant 0 : index
    %c2 = arith.constant 2 : index
    %4 = memref.load %arg2[%c0_2, %c2] : memref<5x8xf32, #tpu.memory_space<smem>>
    %5 = vector.broadcast %4 : f32 to vector<8x128xf32>
    %c0_3 = arith.constant 0 : index
    %c3 = arith.constant 3 : index
    %6 = memref.load %arg2[%c0_3, %c3] : memref<5x8xf32, #tpu.memory_space<smem>>
    %7 = vector.broadcast %6 : f32 to vector<8x128xf32>
    %c0_4 = arith.constant 0 : index
    %c4 = arith.constant 4 : index
    %8 = memref.load %arg2[%c0_4, %c4] : memref<5x8xf32, #tpu.memory_space<smem>>
    %9 = vector.broadcast %8 : f32 to vector<8x128xf32>
    %c0_5 = arith.constant 0 : index
    %c5 = arith.constant 5 : index
    %10 = memref.load %arg2[%c0_5, %c5] : memref<5x8xf32, #tpu.memory_space<smem>>
    %11 = vector.broadcast %10 : f32 to vector<8x128xf32>
    %c0_6 = arith.constant 0 : index
    %c6 = arith.constant 6 : index
    %12 = memref.load %arg2[%c0_6, %c6] : memref<5x8xf32, #tpu.memory_space<smem>>
    %13 = vector.broadcast %12 : f32 to vector<8x128xf32>
    %c0_7 = arith.constant 0 : index
    %c7 = arith.constant 7 : index
    %14 = memref.load %arg2[%c0_7, %c7] : memref<5x8xf32, #tpu.memory_space<smem>>
    %15 = vector.broadcast %14 : f32 to vector<8x128xf32>
    %c0_8 = arith.constant 0 : index
    %c0_9 = arith.constant 0 : index
    %16 = memref.load %arg3[%c0_8, %c0_9] : memref<5x8xf32, #tpu.memory_space<smem>>
    %17 = vector.broadcast %16 : f32 to vector<8x128xf32>
    %c0_10 = arith.constant 0 : index
    %c1_11 = arith.constant 1 : index
    %18 = memref.load %arg3[%c0_10, %c1_11] : memref<5x8xf32, #tpu.memory_space<smem>>
    %19 = vector.broadcast %18 : f32 to vector<8x128xf32>
    %c0_12 = arith.constant 0 : index
    %c2_13 = arith.constant 2 : index
    %20 = memref.load %arg3[%c0_12, %c2_13] : memref<5x8xf32, #tpu.memory_space<smem>>
    %21 = vector.broadcast %20 : f32 to vector<8x128xf32>
    %c0_14 = arith.constant 0 : index
    %c3_15 = arith.constant 3 : index
    %22 = memref.load %arg3[%c0_14, %c3_15] : memref<5x8xf32, #tpu.memory_space<smem>>
    %23 = vector.broadcast %22 : f32 to vector<8x128xf32>
    %c0_16 = arith.constant 0 : index
    %c4_17 = arith.constant 4 : index
    %24 = memref.load %arg3[%c0_16, %c4_17] : memref<5x8xf32, #tpu.memory_space<smem>>
    %25 = vector.broadcast %24 : f32 to vector<8x128xf32>
    %c0_18 = arith.constant 0 : index
    %c5_19 = arith.constant 5 : index
    %26 = memref.load %arg3[%c0_18, %c5_19] : memref<5x8xf32, #tpu.memory_space<smem>>
    %27 = vector.broadcast %26 : f32 to vector<8x128xf32>
    %c0_20 = arith.constant 0 : index
    %c6_21 = arith.constant 6 : index
    %28 = memref.load %arg3[%c0_20, %c6_21] : memref<5x8xf32, #tpu.memory_space<smem>>
    %29 = vector.broadcast %28 : f32 to vector<8x128xf32>
    %c0_22 = arith.constant 0 : index
    %c7_23 = arith.constant 7 : index
    %30 = memref.load %arg3[%c0_22, %c7_23] : memref<5x8xf32, #tpu.memory_space<smem>>
    %31 = vector.broadcast %30 : f32 to vector<8x128xf32>
    %c0_24 = arith.constant 0 : index
    %c0_25 = arith.constant 0 : index
    %32 = vector.load %arg1[%c0_24, %c0_25] : memref<40x128xf32, #tpu.memory_space<vmem>>, vector<8x128xf32>
    %cst = arith.constant 2.000000e+01 : f32
    %33 = vector.broadcast %cst : f32 to vector<8x128xf32>
    %34 = arith.mulf %32, %33 : vector<8x128xf32>
    %35 = arith.subf %34, %1 : vector<8x128xf32>
    %36 = math.absf %35 : vector<8x128xf32>
    %37 = arith.subf %34, %3 : vector<8x128xf32>
    %38 = math.absf %37 : vector<8x128xf32>
    %39 = arith.subf %34, %5 : vector<8x128xf32>
    %40 = math.absf %39 : vector<8x128xf32>
    %41 = arith.subf %34, %7 : vector<8x128xf32>
    %42 = math.absf %41 : vector<8x128xf32>
    %43 = arith.subf %34, %9 : vector<8x128xf32>
    %44 = math.absf %43 : vector<8x128xf32>
    %45 = arith.subf %34, %11 : vector<8x128xf32>
    %46 = math.absf %45 : vector<8x128xf32>
    %47 = arith.subf %34, %13 : vector<8x128xf32>
    %48 = math.absf %47 : vector<8x128xf32>
    %49 = arith.subf %34, %15 : vector<8x128xf32>
    %50 = math.absf %49 : vector<8x128xf32>
    %51 = arith.minimumf %36, %38 : vector<8x128xf32>
    %52 = arith.minimumf %51, %40 : vector<8x128xf32>
    %53 = arith.minimumf %52, %42 : vector<8x128xf32>
    %54 = arith.minimumf %53, %44 : vector<8x128xf32>
    %55 = arith.minimumf %54, %46 : vector<8x128xf32>
    %56 = arith.minimumf %55, %48 : vector<8x128xf32>
    %57 = arith.minimumf %56, %50 : vector<8x128xf32>
    %58 = arith.subf %57, %36 : vector<8x128xf32>
    %59 = math.exp %58 : vector<8x128xf32>
    %60 = arith.mulf %17, %59 : vector<8x128xf32>
    %61 = arith.subf %57, %38 : vector<8x128xf32>
    %62 = math.exp %61 : vector<8x128xf32>
    %63 = arith.mulf %19, %62 : vector<8x128xf32>
    %64 = arith.addf %60, %63 : vector<8x128xf32>
    %65 = arith.addf %59, %62 : vector<8x128xf32>
    %66 = arith.subf %57, %40 : vector<8x128xf32>
    %67 = math.exp %66 : vector<8x128xf32>
    %68 = arith.mulf %21, %67 : vector<8x128xf32>
    %69 = arith.addf %64, %68 : vector<8x128xf32>
    %70 = arith.addf %65, %67 : vector<8x128xf32>
    %71 = arith.subf %57, %42 : vector<8x128xf32>
    %72 = math.exp %71 : vector<8x128xf32>
    %73 = arith.mulf %23, %72 : vector<8x128xf32>
    %74 = arith.addf %69, %73 : vector<8x128xf32>
    %75 = arith.addf %70, %72 : vector<8x128xf32>
    %76 = arith.subf %57, %44 : vector<8x128xf32>
    %77 = math.exp %76 : vector<8x128xf32>
    %78 = arith.mulf %25, %77 : vector<8x128xf32>
    %79 = arith.addf %74, %78 : vector<8x128xf32>
    %80 = arith.addf %75, %77 : vector<8x128xf32>
    %81 = arith.subf %57, %46 : vector<8x128xf32>
    %82 = math.exp %81 : vector<8x128xf32>
    %83 = arith.mulf %27, %82 : vector<8x128xf32>
    %84 = arith.addf %79, %83 : vector<8x128xf32>
    %85 = arith.addf %80, %82 : vector<8x128xf32>
    %86 = arith.subf %57, %48 : vector<8x128xf32>
    %87 = math.exp %86 : vector<8x128xf32>
    %88 = arith.mulf %29, %87 : vector<8x128xf32>
    %89 = arith.addf %84, %88 : vector<8x128xf32>
    %90 = arith.addf %85, %87 : vector<8x128xf32>
    %91 = arith.subf %57, %50 : vector<8x128xf32>
    %92 = math.exp %91 : vector<8x128xf32>
    %93 = arith.mulf %31, %92 : vector<8x128xf32>
    %94 = arith.addf %89, %93 : vector<8x128xf32>
    %95 = arith.addf %90, %92 : vector<8x128xf32>
    %96 = arith.divf %94, %95 : vector<8x128xf32>
    %c0_26 = arith.constant 0 : index
    %c0_27 = arith.constant 0 : index
    %97 = vector.load %arg4[%c0_26, %c0_27] : memref<40x128xf32, #tpu.memory_space<vmem>>, vector<8x128xf32>
    tpu.vector_store %arg4[%c0_26, %c0_27], %96 {strides = array<i32>} : memref<40x128xf32, #tpu.memory_space<vmem>>, vector<8x128xf32>,
    %c1_28 = arith.constant 1 : index
    %c0_29 = arith.constant 0 : index
    %98 = memref.load %arg2[%c1_28, %c0_29] : memref<5x8xf32, #tpu.memory_space<smem>>
    %99 = vector.broadcast %98 : f32 to vector<8x128xf32>
    %c1_30 = arith.constant 1 : index
    %c1_31 = arith.constant 1 : index
    %100 = memref.load %arg2[%c1_30, %c1_31] : memref<5x8xf32, #tpu.memory_space<smem>>
    %101 = vector.broadcast %100 : f32 to vector<8x128xf32>
    %c1_32 = arith.constant 1 : index
    %c2_33 = arith.constant 2 : index
    %102 = memref.load %arg2[%c1_32, %c2_33] : memref<5x8xf32, #tpu.memory_space<smem>>
    %103 = vector.broadcast %102 : f32 to vector<8x128xf32>
    %c1_34 = arith.constant 1 : index
    %c3_35 = arith.constant 3 : index
    %104 = memref.load %arg2[%c1_34, %c3_35] : memref<5x8xf32, #tpu.memory_space<smem>>
    %105 = vector.broadcast %104 : f32 to vector<8x128xf32>
    %c1_36 = arith.constant 1 : index
    %c4_37 = arith.constant 4 : index
    %106 = memref.load %arg2[%c1_36, %c4_37] : memref<5x8xf32, #tpu.memory_space<smem>>
    %107 = vector.broadcast %106 : f32 to vector<8x128xf32>
    %c1_38 = arith.constant 1 : index
    %c5_39 = arith.constant 5 : index
    %108 = memref.load %arg2[%c1_38, %c5_39] : memref<5x8xf32, #tpu.memory_space<smem>>
    %109 = vector.broadcast %108 : f32 to vector<8x128xf32>
    %c1_40 = arith.constant 1 : index
    %c6_41 = arith.constant 6 : index
    %110 = memref.load %arg2[%c1_40, %c6_41] : memref<5x8xf32, #tpu.memory_space<smem>>
    %111 = vector.broadcast %110 : f32 to vector<8x128xf32>
    %c1_42 = arith.constant 1 : index
    %c7_43 = arith.constant 7 : index
    %112 = memref.load %arg2[%c1_42, %c7_43] : memref<5x8xf32, #tpu.memory_space<smem>>
    %113 = vector.broadcast %112 : f32 to vector<8x128xf32>
    %c1_44 = arith.constant 1 : index
    %c0_45 = arith.constant 0 : index
    %114 = memref.load %arg3[%c1_44, %c0_45] : memref<5x8xf32, #tpu.memory_space<smem>>
    %115 = vector.broadcast %114 : f32 to vector<8x128xf32>
    %c1_46 = arith.constant 1 : index
    %c1_47 = arith.constant 1 : index
    %116 = memref.load %arg3[%c1_46, %c1_47] : memref<5x8xf32, #tpu.memory_space<smem>>
    %117 = vector.broadcast %116 : f32 to vector<8x128xf32>
    %c1_48 = arith.constant 1 : index
    %c2_49 = arith.constant 2 : index
    %118 = memref.load %arg3[%c1_48, %c2_49] : memref<5x8xf32, #tpu.memory_space<smem>>
    %119 = vector.broadcast %118 : f32 to vector<8x128xf32>
    %c1_50 = arith.constant 1 : index
    %c3_51 = arith.constant 3 : index
    %120 = memref.load %arg3[%c1_50, %c3_51] : memref<5x8xf32, #tpu.memory_space<smem>>
    %121 = vector.broadcast %120 : f32 to vector<8x128xf32>
    %c1_52 = arith.constant 1 : index
    %c4_53 = arith.constant 4 : index
    %122 = memref.load %arg3[%c1_52, %c4_53] : memref<5x8xf32, #tpu.memory_space<smem>>
    %123 = vector.broadcast %122 : f32 to vector<8x128xf32>
    %c1_54 = arith.constant 1 : index
    %c5_55 = arith.constant 5 : index
    %124 = memref.load %arg3[%c1_54, %c5_55] : memref<5x8xf32, #tpu.memory_space<smem>>
    %125 = vector.broadcast %124 : f32 to vector<8x128xf32>
    %c1_56 = arith.constant 1 : index
    %c6_57 = arith.constant 6 : index
    %126 = memref.load %arg3[%c1_56, %c6_57] : memref<5x8xf32, #tpu.memory_space<smem>>
    %127 = vector.broadcast %126 : f32 to vector<8x128xf32>
    %c1_58 = arith.constant 1 : index
    %c7_59 = arith.constant 7 : index
    %128 = memref.load %arg3[%c1_58, %c7_59] : memref<5x8xf32, #tpu.memory_space<smem>>
    %129 = vector.broadcast %128 : f32 to vector<8x128xf32>
    %c8 = arith.constant 8 : index
    %c0_60 = arith.constant 0 : index
    %130 = vector.load %arg1[%c8, %c0_60] : memref<40x128xf32, #tpu.memory_space<vmem>>, vector<8x128xf32>
    %cst_61 = arith.constant 2.000000e+01 : f32
    %131 = vector.broadcast %cst_61 : f32 to vector<8x128xf32>
    %132 = arith.mulf %130, %131 : vector<8x128xf32>
    %133 = arith.subf %132, %99 : vector<8x128xf32>
    %134 = math.absf %133 : vector<8x128xf32>
    %135 = arith.subf %132, %101 : vector<8x128xf32>
    %136 = math.absf %135 : vector<8x128xf32>
    %137 = arith.subf %132, %103 : vector<8x128xf32>
    %138 = math.absf %137 : vector<8x128xf32>
    %139 = arith.subf %132, %105 : vector<8x128xf32>
    %140 = math.absf %139 : vector<8x128xf32>
    %141 = arith.subf %132, %107 : vector<8x128xf32>
    %142 = math.absf %141 : vector<8x128xf32>
    %143 = arith.subf %132, %109 : vector<8x128xf32>
    %144 = math.absf %143 : vector<8x128xf32>
    %145 = arith.subf %132, %111 : vector<8x128xf32>
    %146 = math.absf %145 : vector<8x128xf32>
    %147 = arith.subf %132, %113 : vector<8x128xf32>
    %148 = math.absf %147 : vector<8x128xf32>
    %149 = arith.minimumf %134, %136 : vector<8x128xf32>
    %150 = arith.minimumf %149, %138 : vector<8x128xf32>
    %151 = arith.minimumf %150, %140 : vector<8x128xf32>
    %152 = arith.minimumf %151, %142 : vector<8x128xf32>
    %153 = arith.minimumf %152, %144 : vector<8x128xf32>
    %154 = arith.minimumf %153, %146 : vector<8x128xf32>
    %155 = arith.minimumf %154, %148 : vector<8x128xf32>
    %156 = arith.subf %155, %134 : vector<8x128xf32>
    %157 = math.exp %156 : vector<8x128xf32>
    %158 = arith.mulf %115, %157 : vector<8x128xf32>
    %159 = arith.subf %155, %136 : vector<8x128xf32>
    %160 = math.exp %159 : vector<8x128xf32>
    %161 = arith.mulf %117, %160 : vector<8x128xf32>
    %162 = arith.addf %158, %161 : vector<8x128xf32>
    %163 = arith.addf %157, %160 : vector<8x128xf32>
    %164 = arith.subf %155, %138 : vector<8x128xf32>
    %165 = math.exp %164 : vector<8x128xf32>
    %166 = arith.mulf %119, %165 : vector<8x128xf32>
    %167 = arith.addf %162, %166 : vector<8x128xf32>
    %168 = arith.addf %163, %165 : vector<8x128xf32>
    %169 = arith.subf %155, %140 : vector<8x128xf32>
    %170 = math.exp %169 : vector<8x128xf32>
    %171 = arith.mulf %121, %170 : vector<8x128xf32>
    %172 = arith.addf %167, %171 : vector<8x128xf32>
    %173 = arith.addf %168, %170 : vector<8x128xf32>
    %174 = arith.subf %155, %142 : vector<8x128xf32>
    %175 = math.exp %174 : vector<8x128xf32>
    %176 = arith.mulf %123, %175 : vector<8x128xf32>
    %177 = arith.addf %172, %176 : vector<8x128xf32>
    %178 = arith.addf %173, %175 : vector<8x128xf32>
    %179 = arith.subf %155, %144 : vector<8x128xf32>
    %180 = math.exp %179 : vector<8x128xf32>
    %181 = arith.mulf %125, %180 : vector<8x128xf32>
    %182 = arith.addf %177, %181 : vector<8x128xf32>
    %183 = arith.addf %178, %180 : vector<8x128xf32>
    %184 = arith.subf %155, %146 : vector<8x128xf32>
    %185 = math.exp %184 : vector<8x128xf32>
    %186 = arith.mulf %127, %185 : vector<8x128xf32>
    %187 = arith.addf %182, %186 : vector<8x128xf32>
    %188 = arith.addf %183, %185 : vector<8x128xf32>
    %189 = arith.subf %155, %148 : vector<8x128xf32>
    %190 = math.exp %189 : vector<8x128xf32>
    %191 = arith.mulf %129, %190 : vector<8x128xf32>
    %192 = arith.addf %187, %191 : vector<8x128xf32>
    %193 = arith.addf %188, %190 : vector<8x128xf32>
    %194 = arith.divf %192, %193 : vector<8x128xf32>
    %c8_62 = arith.constant 8 : index
    %c0_63 = arith.constant 0 : index
    %195 = vector.load %arg4[%c8_62, %c0_63] : memref<40x128xf32, #tpu.memory_space<vmem>>, vector<8x128xf32>
    tpu.vector_store %arg4[%c8_62, %c0_63], %194 {strides = array<i32>} : memref<40x128xf32, #tpu.memory_space<vmem>>, vector<8x128xf32>,
    %c2_64 = arith.constant 2 : index
    %c0_65 = arith.constant 0 : index
    %196 = memref.load %arg2[%c2_64, %c0_65] : memref<5x8xf32, #tpu.memory_space<smem>>
    %197 = vector.broadcast %196 : f32 to vector<8x128xf32>
    %c2_66 = arith.constant 2 : index
    %c1_67 = arith.constant 1 : index
    %198 = memref.load %arg2[%c2_66, %c1_67] : memref<5x8xf32, #tpu.memory_space<smem>>
    %199 = vector.broadcast %198 : f32 to vector<8x128xf32>
    %c2_68 = arith.constant 2 : index
    %c2_69 = arith.constant 2 : index
    %200 = memref.load %arg2[%c2_68, %c2_69] : memref<5x8xf32, #tpu.memory_space<smem>>
    %201 = vector.broadcast %200 : f32 to vector<8x128xf32>
    %c2_70 = arith.constant 2 : index
    %c3_71 = arith.constant 3 : index
    %202 = memref.load %arg2[%c2_70, %c3_71] : memref<5x8xf32, #tpu.memory_space<smem>>
    %203 = vector.broadcast %202 : f32 to vector<8x128xf32>
    %c2_72 = arith.constant 2 : index
    %c4_73 = arith.constant 4 : index
    %204 = memref.load %arg2[%c2_72, %c4_73] : memref<5x8xf32, #tpu.memory_space<smem>>
    %205 = vector.broadcast %204 : f32 to vector<8x128xf32>
    %c2_74 = arith.constant 2 : index
    %c5_75 = arith.constant 5 : index
    %206 = memref.load %arg2[%c2_74, %c5_75] : memref<5x8xf32, #tpu.memory_space<smem>>
    %207 = vector.broadcast %206 : f32 to vector<8x128xf32>
    %c2_76 = arith.constant 2 : index
    %c6_77 = arith.constant 6 : index
    %208 = memref.load %arg2[%c2_76, %c6_77] : memref<5x8xf32, #tpu.memory_space<smem>>
    %209 = vector.broadcast %208 : f32 to vector<8x128xf32>
    %c2_78 = arith.constant 2 : index
    %c7_79 = arith.constant 7 : index
    %210 = memref.load %arg2[%c2_78, %c7_79] : memref<5x8xf32, #tpu.memory_space<smem>>
    %211 = vector.broadcast %210 : f32 to vector<8x128xf32>
    %c2_80 = arith.constant 2 : index
    %c0_81 = arith.constant 0 : index
    %212 = memref.load %arg3[%c2_80, %c0_81] : memref<5x8xf32, #tpu.memory_space<smem>>
    %213 = vector.broadcast %212 : f32 to vector<8x128xf32>
    %c2_82 = arith.constant 2 : index
    %c1_83 = arith.constant 1 : index
    %214 = memref.load %arg3[%c2_82, %c1_83] : memref<5x8xf32, #tpu.memory_space<smem>>
    %215 = vector.broadcast %214 : f32 to vector<8x128xf32>
    %c2_84 = arith.constant 2 : index
    %c2_85 = arith.constant 2 : index
    %216 = memref.load %arg3[%c2_84, %c2_85] : memref<5x8xf32, #tpu.memory_space<smem>>
    %217 = vector.broadcast %216 : f32 to vector<8x128xf32>
    %c2_86 = arith.constant 2 : index
    %c3_87 = arith.constant 3 : index
    %218 = memref.load %arg3[%c2_86, %c3_87] : memref<5x8xf32, #tpu.memory_space<smem>>
    %219 = vector.broadcast %218 : f32 to vector<8x128xf32>
    %c2_88 = arith.constant 2 : index
    %c4_89 = arith.constant 4 : index
    %220 = memref.load %arg3[%c2_88, %c4_89] : memref<5x8xf32, #tpu.memory_space<smem>>
    %221 = vector.broadcast %220 : f32 to vector<8x128xf32>
    %c2_90 = arith.constant 2 : index
    %c5_91 = arith.constant 5 : index
    %222 = memref.load %arg3[%c2_90, %c5_91] : memref<5x8xf32, #tpu.memory_space<smem>>
    %223 = vector.broadcast %222 : f32 to vector<8x128xf32>
    %c2_92 = arith.constant 2 : index
    %c6_93 = arith.constant 6 : index
    %224 = memref.load %arg3[%c2_92, %c6_93] : memref<5x8xf32, #tpu.memory_space<smem>>
    %225 = vector.broadcast %224 : f32 to vector<8x128xf32>
    %c2_94 = arith.constant 2 : index
    %c7_95 = arith.constant 7 : index
    %226 = memref.load %arg3[%c2_94, %c7_95] : memref<5x8xf32, #tpu.memory_space<smem>>
    %227 = vector.broadcast %226 : f32 to vector<8x128xf32>
    %c16 = arith.constant 16 : index
    %c0_96 = arith.constant 0 : index
    %228 = vector.load %arg1[%c16, %c0_96] : memref<40x128xf32, #tpu.memory_space<vmem>>, vector<8x128xf32>
    %cst_97 = arith.constant 2.000000e+01 : f32
    %229 = vector.broadcast %cst_97 : f32 to vector<8x128xf32>
    %230 = arith.mulf %228, %229 : vector<8x128xf32>
    %231 = arith.subf %230, %197 : vector<8x128xf32>
    %232 = math.absf %231 : vector<8x128xf32>
    %233 = arith.subf %230, %199 : vector<8x128xf32>
    %234 = math.absf %233 : vector<8x128xf32>
    %235 = arith.subf %230, %201 : vector<8x128xf32>
    %236 = math.absf %235 : vector<8x128xf32>
    %237 = arith.subf %230, %203 : vector<8x128xf32>
    %238 = math.absf %237 : vector<8x128xf32>
    %239 = arith.subf %230, %205 : vector<8x128xf32>
    %240 = math.absf %239 : vector<8x128xf32>
    %241 = arith.subf %230, %207 : vector<8x128xf32>
    %242 = math.absf %241 : vector<8x128xf32>
    %243 = arith.subf %230, %209 : vector<8x128xf32>
    %244 = math.absf %243 : vector<8x128xf32>
    %245 = arith.subf %230, %211 : vector<8x128xf32>
    %246 = math.absf %245 : vector<8x128xf32>
    %247 = arith.minimumf %232, %234 : vector<8x128xf32>
    %248 = arith.minimumf %247, %236 : vector<8x128xf32>
    %249 = arith.minimumf %248, %238 : vector<8x128xf32>
    %250 = arith.minimumf %249, %240 : vector<8x128xf32>
    %251 = arith.minimumf %250, %242 : vector<8x128xf32>
    %252 = arith.minimumf %251, %244 : vector<8x128xf32>
    %253 = arith.minimumf %252, %246 : vector<8x128xf32>
    %254 = arith.subf %253, %232 : vector<8x128xf32>
    %255 = math.exp %254 : vector<8x128xf32>
    %256 = arith.mulf %213, %255 : vector<8x128xf32>
    %257 = arith.subf %253, %234 : vector<8x128xf32>
    %258 = math.exp %257 : vector<8x128xf32>
    %259 = arith.mulf %215, %258 : vector<8x128xf32>
    %260 = arith.addf %256, %259 : vector<8x128xf32>
    %261 = arith.addf %255, %258 : vector<8x128xf32>
    %262 = arith.subf %253, %236 : vector<8x128xf32>
    %263 = math.exp %262 : vector<8x128xf32>
    %264 = arith.mulf %217, %263 : vector<8x128xf32>
    %265 = arith.addf %260, %264 : vector<8x128xf32>
    %266 = arith.addf %261, %263 : vector<8x128xf32>
    %267 = arith.subf %253, %238 : vector<8x128xf32>
    %268 = math.exp %267 : vector<8x128xf32>
    %269 = arith.mulf %219, %268 : vector<8x128xf32>
    %270 = arith.addf %265, %269 : vector<8x128xf32>
    %271 = arith.addf %266, %268 : vector<8x128xf32>
    %272 = arith.subf %253, %240 : vector<8x128xf32>
    %273 = math.exp %272 : vector<8x128xf32>
    %274 = arith.mulf %221, %273 : vector<8x128xf32>
    %275 = arith.addf %270, %274 : vector<8x128xf32>
    %276 = arith.addf %271, %273 : vector<8x128xf32>
    %277 = arith.subf %253, %242 : vector<8x128xf32>
    %278 = math.exp %277 : vector<8x128xf32>
    %279 = arith.mulf %223, %278 : vector<8x128xf32>
    %280 = arith.addf %275, %279 : vector<8x128xf32>
    %281 = arith.addf %276, %278 : vector<8x128xf32>
    %282 = arith.subf %253, %244 : vector<8x128xf32>
    %283 = math.exp %282 : vector<8x128xf32>
    %284 = arith.mulf %225, %283 : vector<8x128xf32>
    %285 = arith.addf %280, %284 : vector<8x128xf32>
    %286 = arith.addf %281, %283 : vector<8x128xf32>
    %287 = arith.subf %253, %246 : vector<8x128xf32>
    %288 = math.exp %287 : vector<8x128xf32>
    %289 = arith.mulf %227, %288 : vector<8x128xf32>
    %290 = arith.addf %285, %289 : vector<8x128xf32>
    %291 = arith.addf %286, %288 : vector<8x128xf32>
    %292 = arith.divf %290, %291 : vector<8x128xf32>
    %c16_98 = arith.constant 16 : index
    %c0_99 = arith.constant 0 : index
    %293 = vector.load %arg4[%c16_98, %c0_99] : memref<40x128xf32, #tpu.memory_space<vmem>>, vector<8x128xf32>
    tpu.vector_store %arg4[%c16_98, %c0_99], %292 {strides = array<i32>} : memref<40x128xf32, #tpu.memory_space<vmem>>, vector<8x128xf32>,
    %c3_100 = arith.constant 3 : index
    %c0_101 = arith.constant 0 : index
    %294 = memref.load %arg2[%c3_100, %c0_101] : memref<5x8xf32, #tpu.memory_space<smem>>
    %295 = vector.broadcast %294 : f32 to vector<8x128xf32>
    %c3_102 = arith.constant 3 : index
    %c1_103 = arith.constant 1 : index
    %296 = memref.load %arg2[%c3_102, %c1_103] : memref<5x8xf32, #tpu.memory_space<smem>>
    %297 = vector.broadcast %296 : f32 to vector<8x128xf32>
    %c3_104 = arith.constant 3 : index
    %c2_105 = arith.constant 2 : index
    %298 = memref.load %arg2[%c3_104, %c2_105] : memref<5x8xf32, #tpu.memory_space<smem>>
    %299 = vector.broadcast %298 : f32 to vector<8x128xf32>
    %c3_106 = arith.constant 3 : index
    %c3_107 = arith.constant 3 : index
    %300 = memref.load %arg2[%c3_106, %c3_107] : memref<5x8xf32, #tpu.memory_space<smem>>
    %301 = vector.broadcast %300 : f32 to vector<8x128xf32>
    %c3_108 = arith.constant 3 : index
    %c4_109 = arith.constant 4 : index
    %302 = memref.load %arg2[%c3_108, %c4_109] : memref<5x8xf32, #tpu.memory_space<smem>>
    %303 = vector.broadcast %302 : f32 to vector<8x128xf32>
    %c3_110 = arith.constant 3 : index
    %c5_111 = arith.constant 5 : index
    %304 = memref.load %arg2[%c3_110, %c5_111] : memref<5x8xf32, #tpu.memory_space<smem>>
    %305 = vector.broadcast %304 : f32 to vector<8x128xf32>
    %c3_112 = arith.constant 3 : index
    %c6_113 = arith.constant 6 : index
    %306 = memref.load %arg2[%c3_112, %c6_113] : memref<5x8xf32, #tpu.memory_space<smem>>
    %307 = vector.broadcast %306 : f32 to vector<8x128xf32>
    %c3_114 = arith.constant 3 : index
    %c7_115 = arith.constant 7 : index
    %308 = memref.load %arg2[%c3_114, %c7_115] : memref<5x8xf32, #tpu.memory_space<smem>>
    %309 = vector.broadcast %308 : f32 to vector<8x128xf32>
    %c3_116 = arith.constant 3 : index
    %c0_117 = arith.constant 0 : index
    %310 = memref.load %arg3[%c3_116, %c0_117] : memref<5x8xf32, #tpu.memory_space<smem>>
    %311 = vector.broadcast %310 : f32 to vector<8x128xf32>
    %c3_118 = arith.constant 3 : index
    %c1_119 = arith.constant 1 : index
    %312 = memref.load %arg3[%c3_118, %c1_119] : memref<5x8xf32, #tpu.memory_space<smem>>
    %313 = vector.broadcast %312 : f32 to vector<8x128xf32>
    %c3_120 = arith.constant 3 : index
    %c2_121 = arith.constant 2 : index
    %314 = memref.load %arg3[%c3_120, %c2_121] : memref<5x8xf32, #tpu.memory_space<smem>>
    %315 = vector.broadcast %314 : f32 to vector<8x128xf32>
    %c3_122 = arith.constant 3 : index
    %c3_123 = arith.constant 3 : index
    %316 = memref.load %arg3[%c3_122, %c3_123] : memref<5x8xf32, #tpu.memory_space<smem>>
    %317 = vector.broadcast %316 : f32 to vector<8x128xf32>
    %c3_124 = arith.constant 3 : index
    %c4_125 = arith.constant 4 : index
    %318 = memref.load %arg3[%c3_124, %c4_125] : memref<5x8xf32, #tpu.memory_space<smem>>
    %319 = vector.broadcast %318 : f32 to vector<8x128xf32>
    %c3_126 = arith.constant 3 : index
    %c5_127 = arith.constant 5 : index
    %320 = memref.load %arg3[%c3_126, %c5_127] : memref<5x8xf32, #tpu.memory_space<smem>>
    %321 = vector.broadcast %320 : f32 to vector<8x128xf32>
    %c3_128 = arith.constant 3 : index
    %c6_129 = arith.constant 6 : index
    %322 = memref.load %arg3[%c3_128, %c6_129] : memref<5x8xf32, #tpu.memory_space<smem>>
    %323 = vector.broadcast %322 : f32 to vector<8x128xf32>
    %c3_130 = arith.constant 3 : index
    %c7_131 = arith.constant 7 : index
    %324 = memref.load %arg3[%c3_130, %c7_131] : memref<5x8xf32, #tpu.memory_space<smem>>
    %325 = vector.broadcast %324 : f32 to vector<8x128xf32>
    %c24 = arith.constant 24 : index
    %c0_132 = arith.constant 0 : index
    %326 = vector.load %arg1[%c24, %c0_132] : memref<40x128xf32, #tpu.memory_space<vmem>>, vector<8x128xf32>
    %cst_133 = arith.constant 2.000000e+01 : f32
    %327 = vector.broadcast %cst_133 : f32 to vector<8x128xf32>
    %328 = arith.mulf %326, %327 : vector<8x128xf32>
    %329 = arith.subf %328, %295 : vector<8x128xf32>
    %330 = math.absf %329 : vector<8x128xf32>
    %331 = arith.subf %328, %297 : vector<8x128xf32>
    %332 = math.absf %331 : vector<8x128xf32>
    %333 = arith.subf %328, %299 : vector<8x128xf32>
    %334 = math.absf %333 : vector<8x128xf32>
    %335 = arith.subf %328, %301 : vector<8x128xf32>
    %336 = math.absf %335 : vector<8x128xf32>
    %337 = arith.subf %328, %303 : vector<8x128xf32>
    %338 = math.absf %337 : vector<8x128xf32>
    %339 = arith.subf %328, %305 : vector<8x128xf32>
    %340 = math.absf %339 : vector<8x128xf32>
    %341 = arith.subf %328, %307 : vector<8x128xf32>
    %342 = math.absf %341 : vector<8x128xf32>
    %343 = arith.subf %328, %309 : vector<8x128xf32>
    %344 = math.absf %343 : vector<8x128xf32>
    %345 = arith.minimumf %330, %332 : vector<8x128xf32>
    %346 = arith.minimumf %345, %334 : vector<8x128xf32>
    %347 = arith.minimumf %346, %336 : vector<8x128xf32>
    %348 = arith.minimumf %347, %338 : vector<8x128xf32>
    %349 = arith.minimumf %348, %340 : vector<8x128xf32>
    %350 = arith.minimumf %349, %342 : vector<8x128xf32>
    %351 = arith.minimumf %350, %344 : vector<8x128xf32>
    %352 = arith.subf %351, %330 : vector<8x128xf32>
    %353 = math.exp %352 : vector<8x128xf32>
    %354 = arith.mulf %311, %353 : vector<8x128xf32>
    %355 = arith.subf %351, %332 : vector<8x128xf32>
    %356 = math.exp %355 : vector<8x128xf32>
    %357 = arith.mulf %313, %356 : vector<8x128xf32>
    %358 = arith.addf %354, %357 : vector<8x128xf32>
    %359 = arith.addf %353, %356 : vector<8x128xf32>
    %360 = arith.subf %351, %334 : vector<8x128xf32>
    %361 = math.exp %360 : vector<8x128xf32>
    %362 = arith.mulf %315, %361 : vector<8x128xf32>
    %363 = arith.addf %358, %362 : vector<8x128xf32>
    %364 = arith.addf %359, %361 : vector<8x128xf32>
    %365 = arith.subf %351, %336 : vector<8x128xf32>
    %366 = math.exp %365 : vector<8x128xf32>
    %367 = arith.mulf %317, %366 : vector<8x128xf32>
    %368 = arith.addf %363, %367 : vector<8x128xf32>
    %369 = arith.addf %364, %366 : vector<8x128xf32>
    %370 = arith.subf %351, %338 : vector<8x128xf32>
    %371 = math.exp %370 : vector<8x128xf32>
    %372 = arith.mulf %319, %371 : vector<8x128xf32>
    %373 = arith.addf %368, %372 : vector<8x128xf32>
    %374 = arith.addf %369, %371 : vector<8x128xf32>
    %375 = arith.subf %351, %340 : vector<8x128xf32>
    %376 = math.exp %375 : vector<8x128xf32>
    %377 = arith.mulf %321, %376 : vector<8x128xf32>
    %378 = arith.addf %373, %377 : vector<8x128xf32>
    %379 = arith.addf %374, %376 : vector<8x128xf32>
    %380 = arith.subf %351, %342 : vector<8x128xf32>
    %381 = math.exp %380 : vector<8x128xf32>
    %382 = arith.mulf %323, %381 : vector<8x128xf32>
    %383 = arith.addf %378, %382 : vector<8x128xf32>
    %384 = arith.addf %379, %381 : vector<8x128xf32>
    %385 = arith.subf %351, %344 : vector<8x128xf32>
    %386 = math.exp %385 : vector<8x128xf32>
    %387 = arith.mulf %325, %386 : vector<8x128xf32>
    %388 = arith.addf %383, %387 : vector<8x128xf32>
    %389 = arith.addf %384, %386 : vector<8x128xf32>
    %390 = arith.divf %388, %389 : vector<8x128xf32>
    %c24_134 = arith.constant 24 : index
    %c0_135 = arith.constant 0 : index
    %391 = vector.load %arg4[%c24_134, %c0_135] : memref<40x128xf32, #tpu.memory_space<vmem>>, vector<8x128xf32>
    tpu.vector_store %arg4[%c24_134, %c0_135], %390 {strides = array<i32>} : memref<40x128xf32, #tpu.memory_space<vmem>>, vector<8x128xf32>,
    %c4_136 = arith.constant 4 : index
    %c0_137 = arith.constant 0 : index
    %392 = memref.load %arg2[%c4_136, %c0_137] : memref<5x8xf32, #tpu.memory_space<smem>>
    %393 = vector.broadcast %392 : f32 to vector<8x128xf32>
    %c4_138 = arith.constant 4 : index
    %c1_139 = arith.constant 1 : index
    %394 = memref.load %arg2[%c4_138, %c1_139] : memref<5x8xf32, #tpu.memory_space<smem>>
    %395 = vector.broadcast %394 : f32 to vector<8x128xf32>
    %c4_140 = arith.constant 4 : index
    %c2_141 = arith.constant 2 : index
    %396 = memref.load %arg2[%c4_140, %c2_141] : memref<5x8xf32, #tpu.memory_space<smem>>
    %397 = vector.broadcast %396 : f32 to vector<8x128xf32>
    %c4_142 = arith.constant 4 : index
    %c3_143 = arith.constant 3 : index
    %398 = memref.load %arg2[%c4_142, %c3_143] : memref<5x8xf32, #tpu.memory_space<smem>>
    %399 = vector.broadcast %398 : f32 to vector<8x128xf32>
    %c4_144 = arith.constant 4 : index
    %c4_145 = arith.constant 4 : index
    %400 = memref.load %arg2[%c4_144, %c4_145] : memref<5x8xf32, #tpu.memory_space<smem>>
    %401 = vector.broadcast %400 : f32 to vector<8x128xf32>
    %c4_146 = arith.constant 4 : index
    %c5_147 = arith.constant 5 : index
    %402 = memref.load %arg2[%c4_146, %c5_147] : memref<5x8xf32, #tpu.memory_space<smem>>
    %403 = vector.broadcast %402 : f32 to vector<8x128xf32>
    %c4_148 = arith.constant 4 : index
    %c6_149 = arith.constant 6 : index
    %404 = memref.load %arg2[%c4_148, %c6_149] : memref<5x8xf32, #tpu.memory_space<smem>>
    %405 = vector.broadcast %404 : f32 to vector<8x128xf32>
    %c4_150 = arith.constant 4 : index
    %c7_151 = arith.constant 7 : index
    %406 = memref.load %arg2[%c4_150, %c7_151] : memref<5x8xf32, #tpu.memory_space<smem>>
    %407 = vector.broadcast %406 : f32 to vector<8x128xf32>
    %c4_152 = arith.constant 4 : index
    %c0_153 = arith.constant 0 : index
    %408 = memref.load %arg3[%c4_152, %c0_153] : memref<5x8xf32, #tpu.memory_space<smem>>
    %409 = vector.broadcast %408 : f32 to vector<8x128xf32>
    %c4_154 = arith.constant 4 : index
    %c1_155 = arith.constant 1 : index
    %410 = memref.load %arg3[%c4_154, %c1_155] : memref<5x8xf32, #tpu.memory_space<smem>>
    %411 = vector.broadcast %410 : f32 to vector<8x128xf32>
    %c4_156 = arith.constant 4 : index
    %c2_157 = arith.constant 2 : index
    %412 = memref.load %arg3[%c4_156, %c2_157] : memref<5x8xf32, #tpu.memory_space<smem>>
    %413 = vector.broadcast %412 : f32 to vector<8x128xf32>
    %c4_158 = arith.constant 4 : index
    %c3_159 = arith.constant 3 : index
    %414 = memref.load %arg3[%c4_158, %c3_159] : memref<5x8xf32, #tpu.memory_space<smem>>
    %415 = vector.broadcast %414 : f32 to vector<8x128xf32>
    %c4_160 = arith.constant 4 : index
    %c4_161 = arith.constant 4 : index
    %416 = memref.load %arg3[%c4_160, %c4_161] : memref<5x8xf32, #tpu.memory_space<smem>>
    %417 = vector.broadcast %416 : f32 to vector<8x128xf32>
    %c4_162 = arith.constant 4 : index
    %c5_163 = arith.constant 5 : index
    %418 = memref.load %arg3[%c4_162, %c5_163] : memref<5x8xf32, #tpu.memory_space<smem>>
    %419 = vector.broadcast %418 : f32 to vector<8x128xf32>
    %c4_164 = arith.constant 4 : index
    %c6_165 = arith.constant 6 : index
    %420 = memref.load %arg3[%c4_164, %c6_165] : memref<5x8xf32, #tpu.memory_space<smem>>
    %421 = vector.broadcast %420 : f32 to vector<8x128xf32>
    %c4_166 = arith.constant 4 : index
    %c7_167 = arith.constant 7 : index
    %422 = memref.load %arg3[%c4_166, %c7_167] : memref<5x8xf32, #tpu.memory_space<smem>>
    %423 = vector.broadcast %422 : f32 to vector<8x128xf32>
    %c32 = arith.constant 32 : index
    %c0_168 = arith.constant 0 : index
    %424 = vector.load %arg1[%c32, %c0_168] : memref<40x128xf32, #tpu.memory_space<vmem>>, vector<8x128xf32>
    %cst_169 = arith.constant 2.000000e+01 : f32
    %425 = vector.broadcast %cst_169 : f32 to vector<8x128xf32>
    %426 = arith.mulf %424, %425 : vector<8x128xf32>
    %427 = arith.subf %426, %393 : vector<8x128xf32>
    %428 = math.absf %427 : vector<8x128xf32>
    %429 = arith.subf %426, %395 : vector<8x128xf32>
    %430 = math.absf %429 : vector<8x128xf32>
    %431 = arith.subf %426, %397 : vector<8x128xf32>
    %432 = math.absf %431 : vector<8x128xf32>
    %433 = arith.subf %426, %399 : vector<8x128xf32>
    %434 = math.absf %433 : vector<8x128xf32>
    %435 = arith.subf %426, %401 : vector<8x128xf32>
    %436 = math.absf %435 : vector<8x128xf32>
    %437 = arith.subf %426, %403 : vector<8x128xf32>
    %438 = math.absf %437 : vector<8x128xf32>
    %439 = arith.subf %426, %405 : vector<8x128xf32>
    %440 = math.absf %439 : vector<8x128xf32>
    %441 = arith.subf %426, %407 : vector<8x128xf32>
    %442 = math.absf %441 : vector<8x128xf32>
    %443 = arith.minimumf %428, %430 : vector<8x128xf32>
    %444 = arith.minimumf %443, %432 : vector<8x128xf32>
    %445 = arith.minimumf %444, %434 : vector<8x128xf32>
    %446 = arith.minimumf %445, %436 : vector<8x128xf32>
    %447 = arith.minimumf %446, %438 : vector<8x128xf32>
    %448 = arith.minimumf %447, %440 : vector<8x128xf32>
    %449 = arith.minimumf %448, %442 : vector<8x128xf32>
    %450 = arith.subf %449, %428 : vector<8x128xf32>
    %451 = math.exp %450 : vector<8x128xf32>
    %452 = arith.mulf %409, %451 : vector<8x128xf32>
    %453 = arith.subf %449, %430 : vector<8x128xf32>
    %454 = math.exp %453 : vector<8x128xf32>
    %455 = arith.mulf %411, %454 : vector<8x128xf32>
    %456 = arith.addf %452, %455 : vector<8x128xf32>
    %457 = arith.addf %451, %454 : vector<8x128xf32>
    %458 = arith.subf %449, %432 : vector<8x128xf32>
    %459 = math.exp %458 : vector<8x128xf32>
    %460 = arith.mulf %413, %459 : vector<8x128xf32>
    %461 = arith.addf %456, %460 : vector<8x128xf32>
    %462 = arith.addf %457, %459 : vector<8x128xf32>
    %463 = arith.subf %449, %434 : vector<8x128xf32>
    %464 = math.exp %463 : vector<8x128xf32>
    %465 = arith.mulf %415, %464 : vector<8x128xf32>
    %466 = arith.addf %461, %465 : vector<8x128xf32>
    %467 = arith.addf %462, %464 : vector<8x128xf32>
    %468 = arith.subf %449, %436 : vector<8x128xf32>
    %469 = math.exp %468 : vector<8x128xf32>
    %470 = arith.mulf %417, %469 : vector<8x128xf32>
    %471 = arith.addf %466, %470 : vector<8x128xf32>
    %472 = arith.addf %467, %469 : vector<8x128xf32>
    %473 = arith.subf %449, %438 : vector<8x128xf32>
    %474 = math.exp %473 : vector<8x128xf32>
    %475 = arith.mulf %419, %474 : vector<8x128xf32>
    %476 = arith.addf %471, %475 : vector<8x128xf32>
    %477 = arith.addf %472, %474 : vector<8x128xf32>
    %478 = arith.subf %449, %440 : vector<8x128xf32>
    %479 = math.exp %478 : vector<8x128xf32>
    %480 = arith.mulf %421, %479 : vector<8x128xf32>
    %481 = arith.addf %476, %480 : vector<8x128xf32>
    %482 = arith.addf %477, %479 : vector<8x128xf32>
    %483 = arith.subf %449, %442 : vector<8x128xf32>
    %484 = math.exp %483 : vector<8x128xf32>
    %485 = arith.mulf %423, %484 : vector<8x128xf32>
    %486 = arith.addf %481, %485 : vector<8x128xf32>
    %487 = arith.addf %482, %484 : vector<8x128xf32>
    %488 = arith.divf %486, %487 : vector<8x128xf32>
    %c32_170 = arith.constant 32 : index
    %c0_171 = arith.constant 0 : index
    %489 = vector.load %arg4[%c32_170, %c0_171] : memref<40x128xf32, #tpu.memory_space<vmem>>, vector<8x128xf32>
    tpu.vector_store %arg4[%c32_170, %c0_171], %488 {strides = array<i32>} : memref<40x128xf32, #tpu.memory_space<vmem>>, vector<8x128xf32>,
    return
  }
  func.func @transform_0(%arg0: i32) -> (i32, i32) {
    %c0_i32 = arith.constant 0 : i32
    %c0_i32_0 = arith.constant 0 : i32
    return %c0_i32, %arg0 : i32, i32
  }
  func.func @transform_1(%arg0: i32) -> (i32, i32) {
    %c0_i32 = arith.constant 0 : i32
    %c0_i32_0 = arith.constant 0 : i32
    %c0_i32_1 = arith.constant 0 : i32
    return %c0_i32, %c0_i32_0 : i32, i32
  }
  func.func @transform_2(%arg0: i32) -> (i32, i32) {
    %c0_i32 = arith.constant 0 : i32
    %c0_i32_0 = arith.constant 0 : i32
    %c0_i32_1 = arith.constant 0 : i32
    return %c0_i32, %c0_i32_0 : i32, i32
  }
  func.func @transform_3(%arg0: i32) -> (i32, i32) {
    %c0_i32 = arith.constant 0 : i32
    %c0_i32_0 = arith.constant 0 : i32
    return %c0_i32, %arg0 : i32, i32
  }
}

</mosaic_0001>

<llo_original>
// kernel: _bspline_2d.1
$region0: #{_bspline_2d.1}
  #allocation0 [shape = 'u32[]', space=smem, size = 0x4, offset = 0x4, fixed_abs, tag = 'smem constant byte address 0x4 - core index']
  #allocation1 [shape = 'u32[144,128]{1,0:T(1,128)}', space=vmem, size = 0x12000, scoped, tag = 'internal scratch']
  %s0 = inlined_call_operand.vmem [shape: f32[40,128], index: 0, kind: input, shape index: {}]
  %s1 = inlined_call_operand.vmem [shape: f32[5,8], index: 1, kind: input, shape index: {}]
  %s2 = inlined_call_operand.vmem [shape: f32[5,8], index: 2, kind: input, shape index: {}]
  %s3 = inlined_call_operand.vmem [shape: f32[40,128], index: 3, kind: output, shape index: {}]
  %s4 = sld [smem:[#allocation0]]
  $region30: #{_bspline_2d.1} parent=0
    _
  %s6 = ssub.s32 1, %s4
  %s7 = scalar_select 0, %s6, %s4
  $region1: #{_bspline_2d.1} parent=0
    #allocation2 [shape = 'u8[4096]{0}', space=smem, size = 0x1000, scoped, tag = 'input window, operand 1, single buffered']
    #allocation3 [shape = 's32[1]{0}', space=sflag, size = 0x4, scoped, tag = 'scoped memory for _bspline_2d.1']
    #allocation4 [shape = 'u8[4096]{0}', space=smem, size = 0x1000, scoped, tag = 'input window, operand 2, single buffered']
    #allocation5 [shape = 's32[1]{0}', space=sflag, size = 0x4, scoped, tag = 'scoped memory for _bspline_2d.1']
    %8 = vsyncpa [#allocation3], 0
    %9 = vsyncpa [#allocation5], 0
    // Predicated region
    $region2: #{_bspline_2d.1} parent=1 // pred_check
      _
    $region3: #{_bspline_2d.1} parent=1 // pred_check_branch
      %11 = sbr.rel (0) target = $region5
    $region4: #{_bspline_2d.1} parent=1 // pred_region
      _
    $region5: #{_bspline_2d.1} parent=1 // pred_fallthru
      _
    // Predicated region
    $region6: #{_bspline_2d.1} parent=1 // pred_check
      _
    $region7: #{_bspline_2d.1} parent=1 // pred_check_branch
      %13 = sbr.rel (0) target = $region9
    $region8: #{_bspline_2d.1} parent=1 // pred_region
      %s15 = ssub.s32 128, 128
      %16 = vsyncadd [#allocation3], %s15
      %s18 = sshll.u32 %s1, 4
      %s19 = int_to_ptr.vmem [resolvable:$true] %s18
      %21 = dma.vmem_to_smem %s19, 128, [#allocation2], [#allocation3]
    $region9: #{_bspline_2d.1} parent=1 // pred_fallthru
      _
    // Predicated region
    $region10: #{_bspline_2d.1} parent=1 // pred_check
      _
    $region11: #{_bspline_2d.1} parent=1 // pred_check_branch
      %23 = sbr.rel (0) target = $region13
    $region12: #{_bspline_2d.1} parent=1 // pred_region
      %s25 = ssub.s32 128, 128
      %26 = vsyncadd [#allocation5], %s25
      %s28 = sshll.u32 %s2, 4
      %s29 = int_to_ptr.vmem [resolvable:$true] %s28
      %31 = dma.vmem_to_smem %s29, 128, [#allocation4], [#allocation5]
    $region13: #{_bspline_2d.1} parent=1 // pred_fallthru
      _
    // Predicated region
    $region14: #{_bspline_2d.1} parent=1 // pred_check
      _
    $region15: #{_bspline_2d.1} parent=1 // pred_check_branch
      %33 = sbr.rel (0) target = $region17
    $region16: #{_bspline_2d.1} parent=1 // pred_region
      %34 = dma.done [#allocation3], 128
    $region17: #{_bspline_2d.1} parent=1 // pred_fallthru
      _
    // Predicated region
    $region18: #{_bspline_2d.1} parent=1 // pred_check
      _
    $region19: #{_bspline_2d.1} parent=1 // pred_check_branch
      %36 = sbr.rel (0) target = $region21
    $region20: #{_bspline_2d.1} parent=1 // pred_region
      %37 = dma.done [#allocation5], 128
    $region21: #{_bspline_2d.1} parent=1 // pred_fallthru
      _
    %38 = sfence
    %s39 = sld [smem:[#allocation2]]
    %v40 = vstv %s39
    %s41 = sld [smem:[#allocation2 + $0x1]]
    %v42 = vstv %s41
    %s43 = sld [smem:[#allocation2 + $0x2]]
    %v44 = vstv %s43
    %s45 = sld [smem:[#allocation2 + $0x3]]
    %v46 = vstv %s45
    %s47 = sld [smem:[#allocation2 + $0x4]]
    %v48 = vstv %s47
    %s49 = sld [smem:[#allocation2 + $0x5]]
    %v50 = vstv %s49
    %s51 = sld [smem:[#allocation2 + $0x6]]
    %v52 = vstv %s51
    %s53 = sld [smem:[#allocation2 + $0x7]]
    %v54 = vstv %s53
    %s55 = sld [smem:[#allocation4]]
    %v56 = vstv %s55
    %s57 = sld [smem:[#allocation4 + $0x1]]
    %v58 = vstv %s57
    %s59 = sld [smem:[#allocation4 + $0x2]]
    %v60 = vstv %s59
    %s61 = sld [smem:[#allocation4 + $0x3]]
    %v62 = vstv %s61
    %s63 = sld [smem:[#allocation4 + $0x4]]
    %v64 = vstv %s63
    %s65 = sld [smem:[#allocation4 + $0x5]]
    %v66 = vstv %s65
    %s67 = sld [smem:[#allocation4 + $0x6]]
    %v68 = vstv %s67
    %s69 = sld [smem:[#allocation4 + $0x7]]
    %v70 = vstv %s69
    %v71 = vld [vmem:[%s0] sm:$0xff]
    %v72 = vmul.f32 %v71, 20.0
    %v73 = vsub.f32 %v72, %v40
    %v74 = vand.u32 2147483647, %v73
    %v75 = vsub.f32 %v72, %v42
    %v76 = vand.u32 2147483647, %v75
    %v77 = vsub.f32 %v72, %v44
    %v78 = vand.u32 2147483647, %v77
    %v79 = vsub.f32 %v72, %v46
    %v80 = vand.u32 2147483647, %v79
    %v81 = vsub.f32 %v72, %v48
    %v82 = vand.u32 2147483647, %v81
    %v83 = vsub.f32 %v72, %v50
    %v84 = vand.u32 2147483647, %v83
    %v85 = vsub.f32 %v72, %v52
    %v86 = vand.u32 2147483647, %v85
    %v87 = vsub.f32 %v72, %v54
    %v88 = vand.u32 2147483647, %v87
    %v89 = vmin.f32 %v74, %v76
    %v90 = vmin.f32 %v89, %v78
    %v91 = vmin.f32 %v90, %v80
    %v92 = vmin.f32 %v91, %v82
    %v93 = vmin.f32 %v92, %v84
    %v94 = vmin.f32 %v93, %v86
    %v95 = vmin.f32 %v94, %v88
    %v96 = vsub.f32 %v95, %v74
    %v97 = vmul.f32 %v96, 1.442695
    %v98 = vpow.pop %v97
    %v99 = vmul.f32 %v56, %v98
    %v100 = vsub.f32 %v95, %v76
    %v101 = vmul.f32 %v100, 1.442695
    %v102 = vpow.pop %v101
    %v103 = vmul.f32 %v58, %v102
    %v104 = vadd.f32 %v99, %v103
    %v105 = vadd.f32 %v98, %v102
    %v106 = vsub.f32 %v95, %v78
    %v107 = vmul.f32 %v106, 1.442695
    %v108 = vpow.pop %v107
    %v109 = vmul.f32 %v60, %v108
    %v110 = vadd.f32 %v104, %v109
    %v111 = vadd.f32 %v105, %v108
    %v112 = vsub.f32 %v95, %v80
    %v113 = vmul.f32 %v112, 1.442695
    %v114 = vpow.pop %v113
    %v115 = vmul.f32 %v62, %v114
    %v116 = vadd.f32 %v110, %v115
    %v117 = vadd.f32 %v111, %v114
    %v118 = vsub.f32 %v95, %v82
    %v119 = vmul.f32 %v118, 1.442695
    %v120 = vpow.pop %v119
    %v121 = vmul.f32 %v64, %v120
    %v122 = vadd.f32 %v116, %v121
    %v123 = vadd.f32 %v117, %v120
    %v124 = vsub.f32 %v95, %v84
    %v125 = vmul.f32 %v124, 1.442695
    %v126 = vpow.pop %v125
    %v127 = vmul.f32 %v66, %v126
    %v128 = vadd.f32 %v122, %v127
    %v129 = vadd.f32 %v123, %v126
    %v130 = vsub.f32 %v95, %v86
    %v131 = vmul.f32 %v130, 1.442695
    %v132 = vpow.pop %v131
    %v133 = vmul.f32 %v68, %v132
    %v134 = vadd.f32 %v128, %v133
    %v135 = vadd.f32 %v129, %v132
    %v136 = vsub.f32 %v95, %v88
    %v137 = vmul.f32 %v136, 1.442695
    %v138 = vpow.pop %v137
    %v139 = vmul.f32 %v70, %v138
    %v140 = vadd.f32 %v134, %v139
    %v141 = vadd.f32 %v135, %v138
    %v142 = vrcp.pop %v141
    %v143 = vmul.f32 %v140, %v142
    %144 = vst [vmem:[%s3] sm:$0xff] %v143
    %s145 = sld [smem:[#allocation2 + $0x80]]
    %v146 = vstv %s145
    %s147 = sld [smem:[#allocation2 + $0x81]]
    %v148 = vstv %s147
    %s149 = sld [smem:[#allocation2 + $0x82]]
    %v150 = vstv %s149
    %s151 = sld [smem:[#allocation2 + $0x83]]
    %v152 = vstv %s151
    %s153 = sld [smem:[#allocation2 + $0x84]]
    %v154 = vstv %s153
    %s155 = sld [smem:[#allocation2 + $0x85]]
    %v156 = vstv %s155
    %s157 = sld [smem:[#allocation2 + $0x86]]
    %v158 = vstv %s157
    %s159 = sld [smem:[#allocation2 + $0x87]]
    %v160 = vstv %s159
    %s161 = sld [smem:[#allocation4 + $0x80]]
    %v162 = vstv %s161
    %s163 = sld [smem:[#allocation4 + $0x81]]
    %v164 = vstv %s163
    %s165 = sld [smem:[#allocation4 + $0x82]]
    %v166 = vstv %s165
    %s167 = sld [smem:[#allocation4 + $0x83]]
    %v168 = vstv %s167
    %s169 = sld [smem:[#allocation4 + $0x84]]
    %v170 = vstv %s169
    %s171 = sld [smem:[#allocation4 + $0x85]]
    %v172 = vstv %s171
    %s173 = sld [smem:[#allocation4 + $0x86]]
    %v174 = vstv %s173
    %s175 = sld [smem:[#allocation4 + $0x87]]
    %v176 = vstv %s175
    %v177 = vld [vmem:[%s0 + $0x8] sm:$0xff]
    %v178 = vmul.f32 %v177, 20.0
    %v179 = vsub.f32 %v178, %v146
    %v180 = vand.u32 2147483647, %v179
    %v181 = vsub.f32 %v178, %v148
    %v182 = vand.u32 2147483647, %v181
    %v183 = vsub.f32 %v178, %v150
    %v184 = vand.u32 2147483647, %v183
    %v185 = vsub.f32 %v178, %v152
    %v186 = vand.u32 2147483647, %v185
    %v187 = vsub.f32 %v178, %v154
    %v188 = vand.u32 2147483647, %v187
    %v189 = vsub.f32 %v178, %v156
    %v190 = vand.u32 2147483647, %v189
    %v191 = vsub.f32 %v178, %v158
    %v192 = vand.u32 2147483647, %v191
    %v193 = vsub.f32 %v178, %v160
    %v194 = vand.u32 2147483647, %v193
    %v195 = vmin.f32 %v180, %v182
    %v196 = vmin.f32 %v195, %v184
    %v197 = vmin.f32 %v196, %v186
    %v198 = vmin.f32 %v197, %v188
    %v199 = vmin.f32 %v198, %v190
    %v200 = vmin.f32 %v199, %v192
    %v201 = vmin.f32 %v200, %v194
    %v202 = vsub.f32 %v201, %v180
    %v203 = vmul.f32 %v202, 1.442695
    %v204 = vpow.pop %v203
    %v205 = vmul.f32 %v162, %v204
    %v206 = vsub.f32 %v201, %v182
    %v207 = vmul.f32 %v206, 1.442695
    %v208 = vpow.pop %v207
    %v209 = vmul.f32 %v164, %v208
    %v210 = vadd.f32 %v205, %v209
    %v211 = vadd.f32 %v204, %v208
    %v212 = vsub.f32 %v201, %v184
    %v213 = vmul.f32 %v212, 1.442695
    %v214 = vpow.pop %v213
    %v215 = vmul.f32 %v166, %v214
    %v216 = vadd.f32 %v210, %v215
    %v217 = vadd.f32 %v211, %v214
    %v218 = vsub.f32 %v201, %v186
    %v219 = vmul.f32 %v218, 1.442695
    %v220 = vpow.pop %v219
    %v221 = vmul.f32 %v168, %v220
    %v222 = vadd.f32 %v216, %v221
    %v223 = vadd.f32 %v217, %v220
    %v224 = vsub.f32 %v201, %v188
    %v225 = vmul.f32 %v224, 1.442695
    %v226 = vpow.pop %v225
    %v227 = vmul.f32 %v170, %v226
    %v228 = vadd.f32 %v222, %v227
    %v229 = vadd.f32 %v223, %v226
    %v230 = vsub.f32 %v201, %v190
    %v231 = vmul.f32 %v230, 1.442695
    %v232 = vpow.pop %v231
    %v233 = vmul.f32 %v172, %v232
    %v234 = vadd.f32 %v228, %v233
    %v235 = vadd.f32 %v229, %v232
    %v236 = vsub.f32 %v201, %v192
    %v237 = vmul.f32 %v236, 1.442695
    %v238 = vpow.pop %v237
    %v239 = vmul.f32 %v174, %v238
    %v240 = vadd.f32 %v234, %v239
    %v241 = vadd.f32 %v235, %v238
    %v242 = vsub.f32 %v201, %v194
    %v243 = vmul.f32 %v242, 1.442695
    %v244 = vpow.pop %v243
    %v245 = vmul.f32 %v176, %v244
    %v246 = vadd.f32 %v240, %v245
    %v247 = vadd.f32 %v241, %v244
    %v248 = vrcp.pop %v247
    %v249 = vmul.f32 %v246, %v248
    %250 = vst [vmem:[%s3 + $0x8] sm:$0xff] %v249
    %s251 = sld [smem:[#allocation2 + $0x100]]
    %v252 = vstv %s251
    %s253 = sld [smem:[#allocation2 + $0x101]]
    %v254 = vstv %s253
    %s255 = sld [smem:[#allocation2 + $0x102]]
    %v256 = vstv %s255
    %s257 = sld [smem:[#allocation2 + $0x103]]
    %v258 = vstv %s257
    %s259 = sld [smem:[#allocation2 + $0x104]]
    %v260 = vstv %s259
    %s261 = sld [smem:[#allocation2 + $0x105]]
    %v262 = vstv %s261
    %s263 = sld [smem:[#allocation2 + $0x106]]
    %v264 = vstv %s263
    %s265 = sld [smem:[#allocation2 + $0x107]]
    %v266 = vstv %s265
    %s267 = sld [smem:[#allocation4 + $0x100]]
    %v268 = vstv %s267
    %s269 = sld [smem:[#allocation4 + $0x101]]
    %v270 = vstv %s269
    %s271 = sld [smem:[#allocation4 + $0x102]]
    %v272 = vstv %s271
    %s273 = sld [smem:[#allocation4 + $0x103]]
    %v274 = vstv %s273
    %s275 = sld [smem:[#allocation4 + $0x104]]
    %v276 = vstv %s275
    %s277 = sld [smem:[#allocation4 + $0x105]]
    %v278 = vstv %s277
    %s279 = sld [smem:[#allocation4 + $0x106]]
    %v280 = vstv %s279
    %s281 = sld [smem:[#allocation4 + $0x107]]
    %v282 = vstv %s281
    %v283 = vld [vmem:[%s0 + $0x10] sm:$0xff]
    %v284 = vmul.f32 %v283, 20.0
    %v285 = vsub.f32 %v284, %v252
    %v286 = vand.u32 2147483647, %v285
    %v287 = vsub.f32 %v284, %v254
    %v288 = vand.u32 2147483647, %v287
    %v289 = vsub.f32 %v284, %v256
    %v290 = vand.u32 2147483647, %v289
    %v291 = vsub.f32 %v284, %v258
    %v292 = vand.u32 2147483647, %v291
    %v293 = vsub.f32 %v284, %v260
    %v294 = vand.u32 2147483647, %v293
    %v295 = vsub.f32 %v284, %v262
    %v296 = vand.u32 2147483647, %v295
    %v297 = vsub.f32 %v284, %v264
    %v298 = vand.u32 2147483647, %v297
    %v299 = vsub.f32 %v284, %v266
    %v300 = vand.u32 2147483647, %v299
    %v301 = vmin.f32 %v286, %v288
    %v302 = vmin.f32 %v301, %v290
    %v303 = vmin.f32 %v302, %v292
    %v304 = vmin.f32 %v303, %v294
    %v305 = vmin.f32 %v304, %v296
    %v306 = vmin.f32 %v305, %v298
    %v307 = vmin.f32 %v306, %v300
    %v308 = vsub.f32 %v307, %v286
    %v309 = vmul.f32 %v308, 1.442695
    %v310 = vpow.pop %v309
    %v311 = vmul.f32 %v268, %v310
    %v312 = vsub.f32 %v307, %v288
    %v313 = vmul.f32 %v312, 1.442695
    %v314 = vpow.pop %v313
    %v315 = vmul.f32 %v270, %v314
    %v316 = vadd.f32 %v311, %v315
    %v317 = vadd.f32 %v310, %v314
    %v318 = vsub.f32 %v307, %v290
    %v319 = vmul.f32 %v318, 1.442695
    %v320 = vpow.pop %v319
    %v321 = vmul.f32 %v272, %v320
    %v322 = vadd.f32 %v316, %v321
    %v323 = vadd.f32 %v317, %v320
    %v324 = vsub.f32 %v307, %v292
    %v325 = vmul.f32 %v324, 1.442695
    %v326 = vpow.pop %v325
    %v327 = vmul.f32 %v274, %v326
    %v328 = vadd.f32 %v322, %v327
    %v329 = vadd.f32 %v323, %v326
    %v330 = vsub.f32 %v307, %v294
    %v331 = vmul.f32 %v330, 1.442695
    %v332 = vpow.pop %v331
    %v333 = vmul.f32 %v276, %v332
    %v334 = vadd.f32 %v328, %v333
    %v335 = vadd.f32 %v329, %v332
    %v336 = vsub.f32 %v307, %v296
    %v337 = vmul.f32 %v336, 1.442695
    %v338 = vpow.pop %v337
    %v339 = vmul.f32 %v278, %v338
    %v340 = vadd.f32 %v334, %v339
    %v341 = vadd.f32 %v335, %v338
    %v342 = vsub.f32 %v307, %v298
    %v343 = vmul.f32 %v342, 1.442695
    %v344 = vpow.pop %v343
    %v345 = vmul.f32 %v280, %v344
    %v346 = vadd.f32 %v340, %v345
    %v347 = vadd.f32 %v341, %v344
    %v348 = vsub.f32 %v307, %v300
    %v349 = vmul.f32 %v348, 1.442695
    %v350 = vpow.pop %v349
    %v351 = vmul.f32 %v282, %v350
    %v352 = vadd.f32 %v346, %v351
    %v353 = vadd.f32 %v347, %v350
    %v354 = vrcp.pop %v353
    %v355 = vmul.f32 %v352, %v354
    %356 = vst [vmem:[%s3 + $0x10] sm:$0xff] %v355
    %s357 = sld [smem:[#allocation2 + $0x180]]
    %v358 = vstv %s357
    %s359 = sld [smem:[#allocation2 + $0x181]]
    %v360 = vstv %s359
    %s361 = sld [smem:[#allocation2 + $0x182]]
    %v362 = vstv %s361
    %s363 = sld [smem:[#allocation2 + $0x183]]
    %v364 = vstv %s363
    %s365 = sld [smem:[#allocation2 + $0x184]]
    %v366 = vstv %s365
    %s367 = sld [smem:[#allocation2 + $0x185]]
    %v368 = vstv %s367
    %s369 = sld [smem:[#allocation2 + $0x186]]
    %v370 = vstv %s369
    %s371 = sld [smem:[#allocation2 + $0x187]]
    %v372 = vstv %s371
    %s373 = sld [smem:[#allocation4 + $0x180]]
    %v374 = vstv %s373
    %s375 = sld [smem:[#allocation4 + $0x181]]
    %v376 = vstv %s375
    %s377 = sld [smem:[#allocation4 + $0x182]]
    %v378 = vstv %s377
    %s379 = sld [smem:[#allocation4 + $0x183]]
    %v380 = vstv %s379
    %s381 = sld [smem:[#allocation4 + $0x184]]
    %v382 = vstv %s381
    %s383 = sld [smem:[#allocation4 + $0x185]]
    %v384 = vstv %s383
    %s385 = sld [smem:[#allocation4 + $0x186]]
    %v386 = vstv %s385
    %s387 = sld [smem:[#allocation4 + $0x187]]
    %v388 = vstv %s387
    %v389 = vld [vmem:[%s0 + $0x18] sm:$0xff]
    %v390 = vmul.f32 %v389, 20.0
    %v391 = vsub.f32 %v390, %v358
    %v392 = vand.u32 2147483647, %v391
    %v393 = vsub.f32 %v390, %v360
    %v394 = vand.u32 2147483647, %v393
    %v395 = vsub.f32 %v390, %v362
    %v396 = vand.u32 2147483647, %v395
    %v397 = vsub.f32 %v390, %v364
    %v398 = vand.u32 2147483647, %v397
    %v399 = vsub.f32 %v390, %v366
    %v400 = vand.u32 2147483647, %v399
    %v401 = vsub.f32 %v390, %v368
    %v402 = vand.u32 2147483647, %v401
    %v403 = vsub.f32 %v390, %v370
    %v404 = vand.u32 2147483647, %v403
    %v405 = vsub.f32 %v390, %v372
    %v406 = vand.u32 2147483647, %v405
    %v407 = vmin.f32 %v392, %v394
    %v408 = vmin.f32 %v407, %v396
    %v409 = vmin.f32 %v408, %v398
    %v410 = vmin.f32 %v409, %v400
    %v411 = vmin.f32 %v410, %v402
    %v412 = vmin.f32 %v411, %v404
    %v413 = vmin.f32 %v412, %v406
    %v414 = vsub.f32 %v413, %v392
    %v415 = vmul.f32 %v414, 1.442695
    %v416 = vpow.pop %v415
    %v417 = vmul.f32 %v374, %v416
    %v418 = vsub.f32 %v413, %v394
    %v419 = vmul.f32 %v418, 1.442695
    %v420 = vpow.pop %v419
    %v421 = vmul.f32 %v376, %v420
    %v422 = vadd.f32 %v417, %v421
    %v423 = vadd.f32 %v416, %v420
    %v424 = vsub.f32 %v413, %v396
    %v425 = vmul.f32 %v424, 1.442695
    %v426 = vpow.pop %v425
    %v427 = vmul.f32 %v378, %v426
    %v428 = vadd.f32 %v422, %v427
    %v429 = vadd.f32 %v423, %v426
    %v430 = vsub.f32 %v413, %v398
    %v431 = vmul.f32 %v430, 1.442695
    %v432 = vpow.pop %v431
    %v433 = vmul.f32 %v380, %v432
    %v434 = vadd.f32 %v428, %v433
    %v435 = vadd.f32 %v429, %v432
    %v436 = vsub.f32 %v413, %v400
    %v437 = vmul.f32 %v436, 1.442695
    %v438 = vpow.pop %v437
    %v439 = vmul.f32 %v382, %v438
    %v440 = vadd.f32 %v434, %v439
    %v441 = vadd.f32 %v435, %v438
    %v442 = vsub.f32 %v413, %v402
    %v443 = vmul.f32 %v442, 1.442695
    %v444 = vpow.pop %v443
    %v445 = vmul.f32 %v384, %v444
    %v446 = vadd.f32 %v440, %v445
    %v447 = vadd.f32 %v441, %v444
    %v448 = vsub.f32 %v413, %v404
    %v449 = vmul.f32 %v448, 1.442695
    %v450 = vpow.pop %v449
    %v451 = vmul.f32 %v386, %v450
    %v452 = vadd.f32 %v446, %v451
    %v453 = vadd.f32 %v447, %v450
    %v454 = vsub.f32 %v413, %v406
    %v455 = vmul.f32 %v454, 1.442695
    %v456 = vpow.pop %v455
    %v457 = vmul.f32 %v388, %v456
    %v458 = vadd.f32 %v452, %v457
    %v459 = vadd.f32 %v453, %v456
    %v460 = vrcp.pop %v459
    %v461 = vmul.f32 %v458, %v460
    %462 = vst [vmem:[%s3 + $0x18] sm:$0xff] %v461
    %s463 = sld [smem:[#allocation2 + $0x200]]
    %v464 = vstv %s463
    %s465 = sld [smem:[#allocation2 + $0x201]]
    %v466 = vstv %s465
    %s467 = sld [smem:[#allocation2 + $0x202]]
    %v468 = vstv %s467
    %s469 = sld [smem:[#allocation2 + $0x203]]
    %v470 = vstv %s469
    %s471 = sld [smem:[#allocation2 + $0x204]]
    %v472 = vstv %s471
    %s473 = sld [smem:[#allocation2 + $0x205]]
    %v474 = vstv %s473
    %s475 = sld [smem:[#allocation2 + $0x206]]
    %v476 = vstv %s475
    %s477 = sld [smem:[#allocation2 + $0x207]]
    %v478 = vstv %s477
    %s479 = sld [smem:[#allocation4 + $0x200]]
    %v480 = vstv %s479
    %s481 = sld [smem:[#allocation4 + $0x201]]
    %v482 = vstv %s481
    %s483 = sld [smem:[#allocation4 + $0x202]]
    %v484 = vstv %s483
    %s485 = sld [smem:[#allocation4 + $0x203]]
    %v486 = vstv %s485
    %s487 = sld [smem:[#allocation4 + $0x204]]
    %v488 = vstv %s487
    %s489 = sld [smem:[#allocation4 + $0x205]]
    %v490 = vstv %s489
    %s491 = sld [smem:[#allocation4 + $0x206]]
    %v492 = vstv %s491
    %s493 = sld [smem:[#allocation4 + $0x207]]
    %v494 = vstv %s493
    %v495 = vld [vmem:[%s0 + $0x20] sm:$0xff]
    %v496 = vmul.f32 %v495, 20.0
    %v497 = vsub.f32 %v496, %v464
    %v498 = vand.u32 2147483647, %v497
    %v499 = vsub.f32 %v496, %v466
    %v500 = vand.u32 2147483647, %v499
    %v501 = vsub.f32 %v496, %v468
    %v502 = vand.u32 2147483647, %v501
    %v503 = vsub.f32 %v496, %v470
    %v504 = vand.u32 2147483647, %v503
    %v505 = vsub.f32 %v496, %v472
    %v506 = vand.u32 2147483647, %v505
    %v507 = vsub.f32 %v496, %v474
    %v508 = vand.u32 2147483647, %v507
    %v509 = vsub.f32 %v496, %v476
    %v510 = vand.u32 2147483647, %v509
    %v511 = vsub.f32 %v496, %v478
    %v512 = vand.u32 2147483647, %v511
    %v513 = vmin.f32 %v498, %v500
    %v514 = vmin.f32 %v513, %v502
    %v515 = vmin.f32 %v514, %v504
    %v516 = vmin.f32 %v515, %v506
    %v517 = vmin.f32 %v516, %v508
    %v518 = vmin.f32 %v517, %v510
    %v519 = vmin.f32 %v518, %v512
    %v520 = vsub.f32 %v519, %v498
    %v521 = vmul.f32 %v520, 1.442695
    %v522 = vpow.pop %v521
    %v523 = vmul.f32 %v480, %v522
    %v524 = vsub.f32 %v519, %v500
    %v525 = vmul.f32 %v524, 1.442695
    %v526 = vpow.pop %v525
    %v527 = vmul.f32 %v482, %v526
    %v528 = vadd.f32 %v523, %v527
    %v529 = vadd.f32 %v522, %v526
    %v530 = vsub.f32 %v519, %v502
    %v531 = vmul.f32 %v530, 1.442695
    %v532 = vpow.pop %v531
    %v533 = vmul.f32 %v484, %v532
    %v534 = vadd.f32 %v528, %v533
    %v535 = vadd.f32 %v529, %v532
    %v536 = vsub.f32 %v519, %v504
    %v537 = vmul.f32 %v536, 1.442695
    %v538 = vpow.pop %v537
    %v539 = vmul.f32 %v486, %v538
    %v540 = vadd.f32 %v534, %v539
    %v541 = vadd.f32 %v535, %v538
    %v542 = vsub.f32 %v519, %v506
    %v543 = vmul.f32 %v542, 1.442695
    %v544 = vpow.pop %v543
    %v545 = vmul.f32 %v488, %v544
    %v546 = vadd.f32 %v540, %v545
    %v547 = vadd.f32 %v541, %v544
    %v548 = vsub.f32 %v519, %v508
    %v549 = vmul.f32 %v548, 1.442695
    %v550 = vpow.pop %v549
    %v551 = vmul.f32 %v490, %v550
    %v552 = vadd.f32 %v546, %v551
    %v553 = vadd.f32 %v547, %v550
    %v554 = vsub.f32 %v519, %v510
    %v555 = vmul.f32 %v554, 1.442695
    %v556 = vpow.pop %v555
    %v557 = vmul.f32 %v492, %v556
    %v558 = vadd.f32 %v552, %v557
    %v559 = vadd.f32 %v553, %v556
    %v560 = vsub.f32 %v519, %v512
    %v561 = vmul.f32 %v560, 1.442695
    %v562 = vpow.pop %v561
    %v563 = vmul.f32 %v494, %v562
    %v564 = vadd.f32 %v558, %v563
    %v565 = vadd.f32 %v559, %v562
    %v566 = vrcp.pop %v565
    %v567 = vmul.f32 %v564, %v566
    %568 = vst [vmem:[%s3 + $0x20] sm:$0xff] %v567
    // Predicated region
    $region22: #{_bspline_2d.1} parent=1 // pred_check
      _
    $region23: #{_bspline_2d.1} parent=1 // pred_check_branch
      %570 = sbr.rel (0) target = $region25
    $region24: #{_bspline_2d.1} parent=1 // pred_region
      _
    $region25: #{_bspline_2d.1} parent=1 // pred_fallthru
      _
    // Predicated region
    $region26: #{_bspline_2d.1} parent=1 // pred_check
      _
    $region27: #{_bspline_2d.1} parent=1 // pred_check_branch
      %572 = sbr.rel (0) target = $region29
    $region28: #{_bspline_2d.1} parent=1 // pred_region
      _
    $region29: #{_bspline_2d.1} parent=1 // pred_fallthru
      _
    %573 = vsyncpa [#allocation3], 1
    %574 = vsyncpa [#allocation5], 1

</llo_original>
